<compile_context>
chip_gen: v5e
topology: v5e:2x2
jax: 0.10.0
libtpu: 0.0.40
codegen_flags: <defaults>
</compile_context>

<pallas_src>
import numpy as np
import jax
import jax.numpy as jnp
from jax.experimental import pallas as pl
from jax.experimental.pallas import tpu as pltpu

SEEDS = [179424941, 179425457, 179425907, 179426369,
         179424977, 179425517, 179425943, 179426407]

PADDING_IDX = 0


# ----------------------------------------------------------------------------
# Host-side precompute: bloom hash table (done once, as in the PyTorch module).
# TODO(synk): murmurhash3_32 (sklearn) replaced by a deterministic 32-bit
# integer mixer; forward semantics (gather hashed rows, sum over hash fns)
# are unchanged, only the concrete hash mapping differs.
# TODO(synk): hashing is left as host precompute + a tiny XLA gather; folding
# the integer mixer into the kernel needs unsigned 32-bit mul/shift/mod lowering.
# ----------------------------------------------------------------------------
def _surrogate_hash(x, seed):
    x = x.astype(np.uint64) * np.uint64(seed & 0xFFFFFFFF)
    x &= np.uint64(0xFFFFFFFF)
    x ^= x >> np.uint64(16)
    x = (x * np.uint64(0x85EBCA6B)) & np.uint64(0xFFFFFFFF)
    x ^= x >> np.uint64(13)
    x = (x * np.uint64(0xC2B2AE35)) & np.uint64(0xFFFFFFFF)
    x ^= x >> np.uint64(16)
    return x.astype(np.int64)


def build_hash_table(num_embeddings, compressed_num_embeddings,
                     num_hash_functions, padding_idx=PADDING_IDX):
    idx = np.arange(num_embeddings, dtype=np.int64)
    cols = []
    for seed in SEEDS[:num_hash_functions]:
        h = _surrogate_hash(idx, seed)
        h[padding_idx] = 0
        cols.append(h % compressed_num_embeddings)
    hashes = np.stack(cols, axis=1).astype(np.int32)   # (num_embeddings, H)
    assert hashes[padding_idx].sum() == 0
    return jnp.asarray(hashes)


# ----------------------------------------------------------------------------
# Pallas kernel: fused gather + sum over hash functions, per (row tile, R chunk).
#   multi-hot counts (int32 -> bf16) @ bf16 table chunk, f32 accumulation.
# ----------------------------------------------------------------------------
def bloom_embedding_kernel(idx_ref, table_ref, out_ref, acc_ref):
    """idx_ref: (TN, H) i32 hashed indices; table_ref: (TR, E) bf16 chunk;
    out_ref: (TN, E); acc_ref: (TN, E) f32 scratch accumulator."""
    k = pl.program_id(1)
    nk = pl.num_programs(1)
    tn, num_hash = idx_ref.shape
    tr = table_ref.shape[0]

    @pl.when(k == 0)
    def _():
        acc_ref[...] = jnp.zeros_like(acc_ref)

    idx = idx_ref[...]                                               # (TN, H) i32
    base = k * tr                                                    # chunk row offset
    row_ids = base + jax.lax.broadcasted_iota(jnp.int32, (tn, tr), 1)

    # Multi-hot count matrix for this R chunk: entry (i, r) = #{h : hash[i,h] == base+r}.
    # Accumulate in int32 (VALU-cheap), cast once to bf16 for the MXU.
    counts = jnp.zeros((tn, tr), dtype=jnp.int32)
    for j in range(num_hash):                                        # H small & static
        counts = counts + (idx[:, j:j + 1] == row_ids).astype(jnp.int32)
    multihot = counts.astype(jnp.bfloat16)

    # gather + sum over hash functions == multihot @ table (MXU, f32 acc).
    acc_ref[...] += jnp.dot(multihot, table_ref[...],
                            preferred_element_type=jnp.float32)

    @pl.when(k == nk - 1)
    def _():
        out_ref[...] = acc_ref[...].astype(out_ref.dtype)


# ----------------------------------------------------------------------------
# Tiling heuristics
# ----------------------------------------------------------------------------
def _vmem_limit_bytes():
    try:
        cap = pltpu.get_tpu_info().vmem_capacity_bytes
    except Exception:
        cap = 128 * 1024 * 1024
    # ~96 MiB on 128 MiB parts (v5e/v6e), ~48 MiB on 64 MiB parts (v7x).
    return int(min(96 * 1024 * 1024, max(32 * 1024 * 1024, int(cap * 0.75))))


def _choose_tile_n(n, requested=None):
    if requested is not None:
        return requested
    tile = 512                       # big tiles: per-grid-step overhead amortized
    while tile > 128 and pl.cdiv(n, tile) < 2:
        tile //= 2                   # keep grid extent >= 2 so both v7x TCs work
    return max(tile, 128)


def _choose_tile_r(r, e, tile_n, num_hash, vmem_limit):
    """Returns (tile_r, r_pad). Single chunk (fully resident table) when it fits."""
    r_aligned = pl.cdiv(r, 256) * 256                 # MXU-friendly K alignment
    # Fixed per-step VMEM: output block (x2 buffers), f32 accumulator, idx block (x2).
    fixed = tile_n * e * 4 * 2 + tile_n * e * 4 + tile_n * num_hash * 4 * 2
    budget = int(vmem_limit * 0.8) - fixed
    # Per compressed-row cost: table chunk (bf16, <=2 buffers) + multihot working set.
    per_r = e * 2 * 2 + tile_n * 6
    max_tile_r = max(256, (budget // max(per_r, 1)) // 256 * 256)
    if r_aligned <= max_tile_r:
        return r_aligned, r_aligned                   # whole table VMEM-resident
    tile_r = max_tile_r
    r_pad = pl.cdiv(r_aligned, tile_r) * tile_r
    return tile_r, r_pad


# ----------------------------------------------------------------------------
# Wrapper
# ----------------------------------------------------------------------------
def bloom_embedding_forward(indices, hash_table, emb_table, *, tile_n=None,
                            out_dtype=jnp.float32):
    """indices: (B, S) or (B,) int; hash_table: (num_embeddings, H) i32;
    emb_table: (R, E) float. Returns (B, S, E) in out_dtype."""
    if indices.ndim == 2:
        batch_size, seq_size = indices.shape
    else:
        batch_size, seq_size = indices.shape[0], 1
    n = batch_size * seq_size
    num_hash = hash_table.shape[1]
    r, e = emb_table.shape

    # Tiny int gather (N*H int32) to resolve bloom hashes — glue in plain JAX.
    hashed = jnp.take(hash_table, indices.reshape(n).astype(jnp.int32),
                      axis=0).astype(jnp.int32)                      # (N, H)

    vmem_limit = _vmem_limit_bytes()
    tile_n = _choose_tile_n(n, tile_n)
    tile_r, r_pad = _choose_tile_r(r, e, tile_n, num_hash, vmem_limit)
    r_tiles = r_pad // tile_r

    # Pad rows to the tile size (padded rows hash to the zeroed padding row 0).
    n_pad = pl.cdiv(n, tile_n) * tile_n
    if n_pad != n:
        hashed = jnp.pad(hashed, ((0, n_pad - n), (0, 0)))

    # bf16 MXU inputs; zero-pad the compressed rows (numerics unchanged).
    table = emb_table.astype(jnp.bfloat16)
    if r_pad != r:
        table = jnp.pad(table, ((0, r_pad - r), (0, 0)))

    grid = (n_pad // tile_n, r_tiles)
    cost = pl.CostEstimate(
        flops=2 * n_pad * r_pad * e,
        transcendentals=0,
        bytes_accessed=(r_pad * e * 2) * (1 if r_tiles == 1 else grid[0])
        + n_pad * e * jnp.dtype(out_dtype).itemsize
        + n_pad * num_hash * 4,
    )

    # Constant-index resident table -> single buffer; chunked table -> double buffer.
    table_spec = pl.BlockSpec((tile_r, e), lambda i, k: (k, 0),
                              pipeline_mode=pl.Buffered(1) if r_tiles == 1 else None)

    out = pl.pallas_call(
        bloom_embedding_kernel,
        out_shape=jax.ShapeDtypeStruct((n_pad, e), out_dtype),
        grid_spec=pltpu.PrefetchScalarGridSpec(
            num_scalar_prefetch=0,
            grid=grid,
            in_specs=[
                pl.BlockSpec((tile_n, num_hash), lambda i, k: (i, 0)),  # hashed ids
                table_spec,                                             # table chunk
            ],
            out_specs=pl.BlockSpec((tile_n, e), lambda i, k: (i, 0)),   # lane-dense out
            scratch_shapes=[pltpu.VMEM((tile_n, e), jnp.float32)],      # f32 accumulator
        ),
        compiler_params=pltpu.CompilerParams(
            dimension_semantics=("parallel", "arbitrary"),
            vmem_limit_bytes=vmem_limit,
        ),
        cost_estimate=cost,
    )(hashed, table)

    return out[:n].reshape(batch_size, seq_size, e)


def init_params(num_embeddings, embedding_dim, compression_ratio,
                num_hash_functions, key, padding_idx=PADDING_IDX):
    """ScaledEmbedding init over the compressed table + bloom hash table."""
    compressed = int(compression_ratio * num_embeddings)
    emb_table = jax.random.normal(key, (compressed, embedding_dim),
                                  dtype=jnp.float32) * (1.0 / embedding_dim)
    emb_table = emb_table.at[padding_idx].set(0.0)
    hash_table = build_hash_table(num_embeddings, compressed,
                                  num_hash_functions, padding_idx)
    return hash_table, emb_table


if __name__ == "__main__":
    num_embeddings = 1000
    embedding_dim = 128           # lane-dense (multiple of 128)
    compression_ratio = 0.2       # compressed table: 200 rows -> padded to 256
    num_hash_functions = 4
    B, S = 4, 64                  # N = 256 rows -> tile_n=128, grid extent 2

    key = jax.random.PRNGKey(0)
    k_emb, k_idx = jax.random.split(key)

    hash_table, emb_table = init_params(num_embeddings, embedding_dim,
                                        compression_ratio, num_hash_functions,
                                        k_emb)
    indices = jax.random.randint(k_idx, (B, S), 0, num_embeddings,
                                 dtype=jnp.int32)

    out = bloom_embedding_forward(indices, hash_table, emb_table)
    out = jax.block_until_ready(out)

    # Pure-JAX reference of the same math (gather hashed rows, sum over H),
    # using the same bf16-cast table the kernel feeds to the MXU (f32 accumulation).
    hashed_ref = jnp.take(hash_table, indices.reshape(-1), axis=0)              # (N, H)
    table_bf16 = emb_table.astype(jnp.bfloat16).astype(jnp.float32)
    ref = jnp.take(table_bf16, hashed_ref, axis=0).sum(axis=1)                  # (N, E)
    ref = ref.reshape(B, S, embedding_dim)

    assert out.shape == (B, S, embedding_dim)
    assert jnp.allclose(out, ref, atol=1e-4, rtol=1e-4)

    print("KERNEL_OK")
</pallas_src>

<mosaic_0001>
module attributes {stable_mosaic.version = 11 : i64} {
  func.func @bloom_embedding_kernel(%arg0: i32, %arg1: i32, %arg2: memref<128x4xi32, #tpu.memory_space<vmem>>, %arg3: memref<256x128xbf16, #tpu.memory_space<vmem>>, %arg4: memref<128x128xf32, #tpu.memory_space<vmem>>, %arg5: memref<128x128xf32, #tpu.memory_space<vmem>>) attributes {dimension_semantics = [#tpu.dimension_semantics<parallel>, #tpu.dimension_semantics<arbitrary>], iteration_bounds = array<i64: 2, 1>, scalar_prefetch = 0 : i64, scratch_operands = 1 : i64, tpu.core_type = #tpu.core_type<tc>, window_params = [{transform_indices = @transform_0, window_bounds = array<i64: 128, 4>}, {pipeline_mode = #tpu.pipeline_mode<synchronous>, transform_indices = @transform_1, window_bounds = array<i64: 256, 128>}, {transform_indices = @transform_2, window_bounds = array<i64: 128, 128>}]} {
    %c0_i32 = arith.constant 0 : i32
    %0 = arith.cmpi eq, %arg1, %c0_i32 : i32
    %1 = arith.extui %0 : i1 to i32
    %c0_i32_0 = arith.constant 0 : i32
    %2 = arith.cmpi ne, %1, %c0_i32_0 : i32
    scf.if %2 {
      %cst_11 = arith.constant 0.000000e+00 : f32
      %38 = vector.broadcast %cst_11 : f32 to vector<128x128xf32>
      %c0_12 = arith.constant 0 : index
      %c0_13 = arith.constant 0 : index
      %39 = vector.load %arg5[%c0_12, %c0_13] : memref<128x128xf32, #tpu.memory_space<vmem>>, vector<128x128xf32>
      tpu.vector_store %arg5[%c0_12, %c0_13], %38 {strides = array<i32>} : memref<128x128xf32, #tpu.memory_space<vmem>>, vector<128x128xf32>,
    } else {
    }
    %c0 = arith.constant 0 : index
    %c0_1 = arith.constant 0 : index
    %3 = vector.load %arg2[%c0, %c0_1] : memref<128x4xi32, #tpu.memory_space<vmem>>, vector<128x4xi32>
    %c256_i32 = arith.constant 256 : i32
    %4 = arith.muli %arg1, %c256_i32 : i32
    %5 = tpu.iota {dimensions = array<i32: 1>} : vector<128x256xi32>
    %6 = vector.broadcast %4 : i32 to vector<128x256xi32>
    %7 = arith.addi %6, %5 : vector<128x256xi32>
    %c0_i32_2 = arith.constant 0 : i32
    %8 = vector.broadcast %c0_i32_2 : i32 to vector<128x256xi32>
    %9 = vector.extract_strided_slice %3 {offsets = [0, 0], sizes = [128, 1], strides = [1, 1]} : vector<128x4xi32> to vector<128x1xi32>
    %10 = vector.broadcast %9 : vector<128x1xi32> to vector<128x256xi32>
    %11 = arith.cmpi eq, %10, %7 : vector<128x256xi32>
    %12 = arith.extui %11 : vector<128x256xi1> to vector<128x256xi32>
    %13 = arith.addi %8, %12 : vector<128x256xi32>
    %14 = vector.extract_strided_slice %3 {offsets = [0, 1], sizes = [128, 1], strides = [1, 1]} : vector<128x4xi32> to vector<128x1xi32>
    %15 = vector.broadcast %14 : vector<128x1xi32> to vector<128x256xi32>
    %16 = arith.cmpi eq, %15, %7 : vector<128x256xi32>
    %17 = arith.extui %16 : vector<128x256xi1> to vector<128x256xi32>
    %18 = arith.addi %13, %17 : vector<128x256xi32>
    %19 = vector.extract_strided_slice %3 {offsets = [0, 2], sizes = [128, 1], strides = [1, 1]} : vector<128x4xi32> to vector<128x1xi32>
    %20 = vector.broadcast %19 : vector<128x1xi32> to vector<128x256xi32>
    %21 = arith.cmpi eq, %20, %7 : vector<128x256xi32>
    %22 = arith.extui %21 : vector<128x256xi1> to vector<128x256xi32>
    %23 = arith.addi %18, %22 : vector<128x256xi32>
    %24 = vector.extract_strided_slice %3 {offsets = [0, 3], sizes = [128, 1], strides = [1, 1]} : vector<128x4xi32> to vector<128x1xi32>
    %25 = vector.broadcast %24 : vector<128x1xi32> to vector<128x256xi32>
    %26 = arith.cmpi eq, %25, %7 : vector<128x256xi32>
    %27 = arith.extui %26 : vector<128x256xi1> to vector<128x256xi32>
    %28 = arith.addi %23, %27 : vector<128x256xi32>
    %29 = arith.sitofp %28 : vector<128x256xi32> to vector<128x256xbf16>
    %c0_3 = arith.constant 0 : index
    %c0_4 = arith.constant 0 : index
    %30 = vector.load %arg5[%c0_3, %c0_4] : memref<128x128xf32, #tpu.memory_space<vmem>>, vector<128x128xf32>
    %c0_5 = arith.constant 0 : index
    %c0_6 = arith.constant 0 : index
    %31 = vector.load %arg3[%c0_5, %c0_6] : memref<256x128xbf16, #tpu.memory_space<vmem>>, vector<256x128xbf16>
    %cst = arith.constant dense<0.000000e+00> : vector<128x128xf32>
    %32 = tpu.matmul %29, %31, %cst {dimension_numbers = #tpu.dot_dimension_numbers<[1], [0], [0], [1], [0, 0, 1, 1], [], []>} : vector<128x256xbf16>, vector<256x128xbf16>, vector<128x128xf32> -> vector<128x128xf32>
    %33 = arith.addf %30, %32 : vector<128x128xf32>
    %c0_7 = arith.constant 0 : index
    %c0_8 = arith.constant 0 : index
    %34 = vector.load %arg5[%c0_7, %c0_8] : memref<128x128xf32, #tpu.memory_space<vmem>>, vector<128x128xf32>
    tpu.vector_store %arg5[%c0_7, %c0_8], %33 {strides = array<i32>} : memref<128x128xf32, #tpu.memory_space<vmem>>, vector<128x128xf32>,
    %c0_i32_9 = arith.constant 0 : i32
    %35 = arith.cmpi eq, %arg1, %c0_i32_9 : i32
    %36 = arith.extui %35 : i1 to i32
    %c0_i32_10 = arith.constant 0 : i32
    %37 = arith.cmpi ne, %36, %c0_i32_10 : i32
    scf.if %37 {
      %c0_11 = arith.constant 0 : index
      %c0_12 = arith.constant 0 : index
      %38 = vector.load %arg5[%c0_11, %c0_12] : memref<128x128xf32, #tpu.memory_space<vmem>>, vector<128x128xf32>
      %c0_13 = arith.constant 0 : index
      %c0_14 = arith.constant 0 : index
      %39 = vector.load %arg4[%c0_13, %c0_14] : memref<128x128xf32, #tpu.memory_space<vmem>>, vector<128x128xf32>
      tpu.vector_store %arg4[%c0_13, %c0_14], %38 {strides = array<i32>} : memref<128x128xf32, #tpu.memory_space<vmem>>, vector<128x128xf32>,
    } else {
    }
    return
  }
  func.func @transform_0(%arg0: i32, %arg1: i32) -> (i32, i32) {
    %c0_i32 = arith.constant 0 : i32
    %c0_i32_0 = arith.constant 0 : i32
    return %arg0, %c0_i32 : i32, i32
  }
  func.func @transform_1(%arg0: i32, %arg1: i32) -> (i32, i32) {
    %c0_i32 = arith.constant 0 : i32
    %c0_i32_0 = arith.constant 0 : i32
    return %arg1, %c0_i32 : i32, i32
  }
  func.func @transform_2(%arg0: i32, %arg1: i32) -> (i32, i32) {
    %c0_i32 = arith.constant 0 : i32
    %c0_i32_0 = arith.constant 0 : i32
    return %arg0, %c0_i32 : i32, i32
  }
}

</mosaic_0001>

<llo_original>
// kernel: tpu_custom_call.1
$region0: #{tpu_custom_call.1}
  #allocation0 [shape = 'u32[]', space=smem, size = 0x4, offset = 0x4, fixed_abs, tag = 'smem constant byte address 0x4 - core index']
  #allocation1 [shape = 'u32[72,128]{1,0:T(1,128)}', space=vmem, size = 0x9000, scoped, tag = 'internal scratch']
  #allocation2 [shape = 'f32[128,128]{1,0:T(8,128)}', space=vmem, size = 0x10000, scoped, tag = 'scratch operand']
  %s0 = inlined_call_operand.vmem [shape: s32[256,4], index: 0, kind: input, shape index: {}]
  %s1 = inlined_call_operand.vmem [shape: bf16[256,128], index: 1, kind: input, shape index: {}]
  %s2 = inlined_call_operand.hbm [shape: f32[256,128], index: 2, kind: output, shape index: {}]
  %s3 = sld [smem:[#allocation0]]
  $region49: #{tpu_custom_call.1} parent=0
    _
  %s5 = ssub.s32 1, %s3
  %s6 = scalar_select 0, %s5, %s3
  $region1: #{tpu_custom_call.1} parent=0
    #allocation3 [shape = 'u8[131072]{0}', space=vmem, size = 0x20000, scoped, tag = 'output window, operand 0']
    #allocation4 [shape = 's32[2]{0}', space=sflag, size = 0x8, scoped, tag = 'scoped memory for tpu_custom_call.1']
    %7 = vsyncpa [#allocation4], 0
    %s8 = scalar_lea.sflag [#allocation4], 1
    %9 = vsyncpa %s8, 0
    loop: start=0, step=1, limit=4
    $region2: #{tpu_custom_call.1} parent=1 // loop_pre_header
      _
    $region3: #{tpu_custom_call.1} parent=1 // loop_header
      %s11 = sphi 0, %s15
      %p12 = scmp.ge.s32.totalorder %s11, 4
      %s18 = sphi 0, %s30
      %s19 = sphi 0, %s26
      %s20 = sphi 0, %s18
      %s21 = sphi 0, %s19
      %s22 = sphi 0, %s20
      %s23 = sphi 0, %s21
      %s33 = sphi 0, %s35
      %s36 = sphi 0, %s33
      %s37 = sphi 0, %s36
      %s53 = sphi 0, %s37
      %s59 = sphi 0, %s61
      %s62 = sphi 0, %s59
      %s63 = sphi 0, %s62
      %s79 = sphi 0, %s63
      %s85 = sphi 0, %s87
      %s88 = sphi 0, %s85
      %s89 = sphi 0, %s88
      %s105 = sphi 0, %s89
    $region4: #{tpu_custom_call.1} parent=1 // loop_header_branch
      %14 = sbr.rel (%p12) target = $region8
    $region5: #{tpu_custom_call.1} parent=1 // loop_body
      %s16 = ssub.s32 %s11, 1
      %s17 = ssub.s32 %s11, 2
      %s24 = sadd.s32 1, %s19
      %p25 = scmp.ge.s32.totalorder %s24, 1
      %s26 = scalar_select %p25, 0, %s24
      %s27 = sadd.s32 1, %s18
      %s28 = scalar_select %p25, %s27, %s18
      %p29 = scmp.ge.s32.totalorder %s28, 2
      %s30 = scalar_select %p29, 0, %s28
      %s31 = ssub.s32 %s18, %s30
      %p32 = scmp.eq.s32.totalorder %s31, 0
      %s34 = sadd.s32 %s33, 1
      %s35 = scalar_select %p32, %s33, %s34
      %p38 = pneg %p32
      %p39 = scmp.eq.s32.totalorder %s11, 1
      %p40 = por %p38, %p39
      %p41 = scmp.ne.s32.totalorder %s33, %s36
      %p42 = scmp.eq.s32.totalorder %s11, 0
      %p43 = por %p41, %p42
      %p44 = scmp.ne.s32.totalorder %s33, %s36
      %p45 = scmp.eq.s32.totalorder %s16, 1
      %p46 = por %p44, %p45
      %p47 = scmp.ne.s32.totalorder %s36, %s37
      %p48 = scmp.eq.s32.totalorder %s16, 0
      %p49 = por %p47, %p48
      %p50 = scmp.ne.s32.totalorder %s36, %s37
      %p51 = scmp.eq.s32.totalorder %s17, 1
      %p52 = por %p50, %p51
      %p54 = scmp.ne.s32.totalorder %s37, %s53
      %p55 = scmp.eq.s32.totalorder %s17, 0
      %p56 = por %p54, %p55
      %s57 = ssub.s32 %s19, %s26
      %p58 = scmp.eq.s32.totalorder %s57, 0
      %s60 = sadd.s32 %s59, 1
      %s61 = scalar_select %p58, %s59, %s60
      %p64 = pneg %p58
      %p65 = scmp.eq.s32.totalorder %s11, 1
      %p66 = por %p64, %p65
      %p67 = scmp.ne.s32.totalorder %s59, %s62
      %p68 = scmp.eq.s32.totalorder %s11, 0
      %p69 = por %p67, %p68
      %p70 = scmp.ne.s32.totalorder %s59, %s62
      %p71 = scmp.eq.s32.totalorder %s16, 1
      %p72 = por %p70, %p71
      %p73 = scmp.ne.s32.totalorder %s62, %s63
      %p74 = scmp.eq.s32.totalorder %s16, 0
      %p75 = por %p73, %p74
      %p76 = scmp.ne.s32.totalorder %s62, %s63
      %p77 = scmp.eq.s32.totalorder %s17, 1
      %p78 = por %p76, %p77
      %p80 = scmp.ne.s32.totalorder %s63, %s79
      %p81 = scmp.eq.s32.totalorder %s17, 0
      %p82 = por %p80, %p81
      %s83 = ssub.s32 %s18, %s30
      %p84 = scmp.eq.s32.totalorder %s83, 0
      %s86 = sadd.s32 %s85, 1
      %s87 = scalar_select %p84, %s85, %s86
      %p90 = pneg %p84
      %p91 = scmp.eq.s32.totalorder %s11, 1
      %p92 = por %p90, %p91
      %p93 = scmp.ne.s32.totalorder %s85, %s88
      %p94 = scmp.eq.s32.totalorder %s11, 0
      %p95 = por %p93, %p94
      %p96 = scmp.ne.s32.totalorder %s85, %s88
      %p97 = scmp.eq.s32.totalorder %s16, 1
      %p98 = por %p96, %p97
      %p99 = scmp.ne.s32.totalorder %s88, %s89
      %p100 = scmp.eq.s32.totalorder %s16, 0
      %p101 = por %p99, %p100
      %p102 = scmp.ne.s32.totalorder %s88, %s89
      %p103 = scmp.eq.s32.totalorder %s17, 1
      %p104 = por %p102, %p103
      %p106 = scmp.ne.s32.totalorder %s89, %s105
      %p107 = scmp.eq.s32.totalorder %s17, 0
      %p108 = por %p106, %p107
      %p109 = scmp.le.s32.totalorder 1, %s11
      %p110 = scmp.lt.s32.totalorder %s11, 3
      %p111 = pnand %p109, %p110
      %p112 = pneg %p111
      // Predicated region
      $region9: #{tpu_custom_call.1} parent=5 // pred_check
        _
      $region10: #{tpu_custom_call.1} parent=5 // pred_check_branch
        %114 = sbr.rel (%p111) target = $region12
      $region11: #{tpu_custom_call.1} parent=5 // pred_region
        %s115 = ssub.s32 %s11, 1
        // Predicated region
        $region13: #{tpu_custom_call.1} parent=11 // pred_check
          %p116 = pneg %p75
        $region14: #{tpu_custom_call.1} parent=11 // pred_check_branch
          %118 = sbr.rel (%p116) target = $region16
        $region15: #{tpu_custom_call.1} parent=11 // pred_region
          %s119 = smul.u32 32, %s21
          %p120 = scmp.lt.s32.totalorder %s119, 31
          %s121 = scalar_select %p120, %s119, 31
          %s122 = smul.addr %s121, 4
          %s123 = scalar_lea.vmem %s1, %s122
          %s124 = smul.u32 32, %s21
        $region16: #{tpu_custom_call.1} parent=11 // pred_fallthru
          _
      $region12: #{tpu_custom_call.1} parent=5 // pred_fallthru
        _
      %p125 = scmp.lt.s32.totalorder %s11, 2
      // Predicated region
      $region17: #{tpu_custom_call.1} parent=5 // pred_check
        %p126 = pneg %p125
      $region18: #{tpu_custom_call.1} parent=5 // pred_check_branch
        %128 = sbr.rel (%p126) target = $region20
      $region19: #{tpu_custom_call.1} parent=5 // pred_region
        // Predicated region
        $region21: #{tpu_custom_call.1} parent=19 // pred_check
          %p129 = pneg %p43
        $region22: #{tpu_custom_call.1} parent=19 // pred_check_branch
          %131 = sbr.rel (%p129) target = $region24
        $region23: #{tpu_custom_call.1} parent=19 // pred_region
          %s132 = smul.u32 16, %s18
          %p133 = scmp.lt.s32.totalorder %s132, 31
          %s134 = scalar_select %p133, %s132, 31
          %s135 = smul.addr %s134, 8
          %s136 = scalar_lea.vmem %s0, %s135
          %s137 = smul.u32 16, %s18
        $region24: #{tpu_custom_call.1} parent=19 // pred_fallthru
          _
      $region20: #{tpu_custom_call.1} parent=5 // pred_fallthru
        _
      %p138 = scmp.le.s32.totalorder 1, %s11
      %p139 = scmp.lt.s32.totalorder %s11, 3
      %p140 = pnand %p138, %p139
      %p141 = pneg %p140
      // Predicated region
      $region25: #{tpu_custom_call.1} parent=5 // pred_check
        _
      $region26: #{tpu_custom_call.1} parent=5 // pred_check_branch
        %143 = sbr.rel (%p140) target = $region28
      $region27: #{tpu_custom_call.1} parent=5 // pred_region
        %s144 = ssub.s32 %s11, 1
        %s145 = smul.u32 16, %s20
        %p146 = scmp.lt.s32.totalorder %s145, 31
        %s147 = scalar_select %p146, %s145, 31
        %s148 = smul.addr %s147, 8
        %s149 = scalar_lea.vmem %s0, %s148
        %p150 = pneg %p49
        %p151 = pneg %p46
        %s152 = smul.u32 32, %s21
        %p153 = scmp.lt.s32.totalorder %s152, 31
        %s154 = scalar_select %p153, %s152, 31
        %s155 = smul.addr %s154, 4
        %s156 = scalar_lea.vmem %s1, %s155
        %p157 = pneg %p75
        %p158 = pneg %p72
        %p159 = pneg %p101
        %p160 = pneg %p98
        %s161 = sand.u32 %s88, 1
        %s162 = scalar_lea.sflag [#allocation4], %s161
        %s163 = sand.u32 %s88, 1
        %s164 = smul.addr %s163, 128
        %s165 = scalar_lea.vmem [#allocation3], %s164
        %s166 = smul.u32 16, %s20
        %p167 = scmp.lt.s32.totalorder %s166, 31
        %s168 = scalar_select %p167, %s166, 31
        %s169 = smul.addr %s168, 8
        %s170 = scalar_lea.vmem %s0, %s169
        %s171 = smul.u32 16, %s20
        %s172 = smul.u32 32, %s21
        %p173 = scmp.lt.s32.totalorder %s172, 31
        %s174 = scalar_select %p173, %s172, 31
        %s175 = smul.addr %s174, 4
        %s176 = scalar_lea.vmem %s1, %s175
        %s177 = smul.u32 32, %s21
        %s178 = smul.u32 16, %s20
        %p179 = scmp.eq.s32.totalorder %s21, 0
        // Predicated region
        $region29: #{tpu_custom_call.1} parent=27 // pred_check
          %p180 = pneg %p179
        $region30: #{tpu_custom_call.1} parent=27 // pred_check_branch
          %182 = sbr.rel (%p180) target = $region32
        $region31: #{tpu_custom_call.1} parent=27 // pred_region
          %183 = vst [vmem:[#allocation2] sm:$0xff] 0.0
          %184 = vst [vmem:[#allocation2 + $0x8] sm:$0xff] 0.0
          %185 = vst [vmem:[#allocation2 + $0x10] sm:$0xff] 0.0
          %186 = vst [vmem:[#allocation2 + $0x18] sm:$0xff] 0.0
          %187 = vst [vmem:[#allocation2 + $0x20] sm:$0xff] 0.0
          %188 = vst [vmem:[#allocation2 + $0x28] sm:$0xff] 0.0
          %189 = vst [vmem:[#allocation2 + $0x30] sm:$0xff] 0.0
          %190 = vst [vmem:[#allocation2 + $0x38] sm:$0xff] 0.0
          %191 = vst [vmem:[#allocation2 + $0x40] sm:$0xff] 0.0
          %192 = vst [vmem:[#allocation2 + $0x48] sm:$0xff] 0.0
          %193 = vst [vmem:[#allocation2 + $0x50] sm:$0xff] 0.0
          %194 = vst [vmem:[#allocation2 + $0x58] sm:$0xff] 0.0
          %195 = vst [vmem:[#allocation2 + $0x60] sm:$0xff] 0.0
          %196 = vst [vmem:[#allocation2 + $0x68] sm:$0xff] 0.0
          %197 = vst [vmem:[#allocation2 + $0x70] sm:$0xff] 0.0
          %198 = vst [vmem:[#allocation2 + $0x78] sm:$0xff] 0.0
        $region32: #{tpu_custom_call.1} parent=27 // pred_fallthru
          _
        %v199 = vld [vmem:[%s170] sm:$0xff]
        %v200 = vld [vmem:[%s170 + $0x8] sm:$0xff]
        %v201 = vld [vmem:[%s170 + $0x10] sm:$0xff]
        %v202 = vld [vmem:[%s170 + $0x18] sm:$0xff]
        %v203 = vld [vmem:[%s170 + $0x20] sm:$0xff]
        %v204 = vld [vmem:[%s170 + $0x28] sm:$0xff]
        %v205 = vld [vmem:[%s170 + $0x30] sm:$0xff]
        %v206 = vld [vmem:[%s170 + $0x38] sm:$0xff]
        %v207 = vld [vmem:[%s170 + $0x40] sm:$0xff]
        %v208 = vld [vmem:[%s170 + $0x48] sm:$0xff]
        %v209 = vld [vmem:[%s170 + $0x50] sm:$0xff]
        %v210 = vld [vmem:[%s170 + $0x58] sm:$0xff]
        %v211 = vld [vmem:[%s170 + $0x60] sm:$0xff]
        %v212 = vld [vmem:[%s170 + $0x68] sm:$0xff]
        %v213 = vld [vmem:[%s170 + $0x70] sm:$0xff]
        %v214 = vld [vmem:[%s170 + $0x78] sm:$0xff]
        %s215 = smul.u32 %s21, 256
        %v216 = vlaneseq
        %v217 = vand.u32 %v216, 127
        %v218 = vadd.s32 %v217, 128
        %v219 = vstv %s215
        %v220 = vadd.s32 %v219, %v217
        %v221 = vadd.s32 %v219, %v218
        %222 = vset.pattern.permute.xlu0 0
        %223 = vperm.xlu0 %222, %v199
        %v224 = vpop.permute.xlu0 %223
        %225 = vset.pattern.permute.xlu0 0
        %226 = vperm.xlu0 %225, %v200
        %v227 = vpop.permute.xlu0 %226
        %228 = vset.pattern.permute.xlu0 0
        %229 = vperm.xlu0 %228, %v201
        %v230 = vpop.permute.xlu0 %229
        %231 = vset.pattern.permute.xlu0 0
        %232 = vperm.xlu0 %231, %v202
        %v233 = vpop.permute.xlu0 %232
        %234 = vset.pattern.permute.xlu0 0
        %235 = vperm.xlu0 %234, %v203
        %v236 = vpop.permute.xlu0 %235
        %237 = vset.pattern.permute.xlu0 0
        %238 = vperm.xlu0 %237, %v204
        %v239 = vpop.permute.xlu0 %238
        %240 = vset.pattern.permute.xlu0 0
        %241 = vperm.xlu0 %240, %v205
        %v242 = vpop.permute.xlu0 %241
        %243 = vset.pattern.permute.xlu0 0
        %244 = vperm.xlu0 %243, %v206
        %v245 = vpop.permute.xlu0 %244
        %246 = vset.pattern.permute.xlu0 0
        %247 = vperm.xlu0 %246, %v207
        %v248 = vpop.permute.xlu0 %247
        %249 = vset.pattern.permute.xlu0 0
        %250 = vperm.xlu0 %249, %v208
        %v251 = vpop.permute.xlu0 %250
        %252 = vset.pattern.permute.xlu0 0
        %253 = vperm.xlu0 %252, %v209
        %v254 = vpop.permute.xlu0 %253
        %255 = vset.pattern.permute.xlu0 0
        %256 = vperm.xlu0 %255, %v210
        %v257 = vpop.permute.xlu0 %256
        %258 = vset.pattern.permute.xlu0 0
        %259 = vperm.xlu0 %258, %v211
        %v260 = vpop.permute.xlu0 %259
        %261 = vset.pattern.permute.xlu0 0
        %262 = vperm.xlu0 %261, %v212
        %v263 = vpop.permute.xlu0 %262
        %264 = vset.pattern.permute.xlu0 0
        %265 = vperm.xlu0 %264, %v213
        %v266 = vpop.permute.xlu0 %265
        %267 = vset.pattern.permute.xlu0 0
        %268 = vperm.xlu0 %267, %v214
        %v269 = vpop.permute.xlu0 %268
        %vm270 = vcmp.eq.s32.totalorder %v224, %v220
        %vm271 = vcmp.eq.s32.totalorder %v224, %v221
        %vm272 = vcmp.eq.s32.totalorder %v227, %v220
        %vm273 = vcmp.eq.s32.totalorder %v227, %v221
        %vm274 = vcmp.eq.s32.totalorder %v230, %v220
        %vm275 = vcmp.eq.s32.totalorder %v230, %v221
        %vm276 = vcmp.eq.s32.totalorder %v233, %v220
        %vm277 = vcmp.eq.s32.totalorder %v233, %v221
        %vm278 = vcmp.eq.s32.totalorder %v236, %v220
        %vm279 = vcmp.eq.s32.totalorder %v236, %v221
        %vm280 = vcmp.eq.s32.totalorder %v239, %v220
        %vm281 = vcmp.eq.s32.totalorder %v239, %v221
        %vm282 = vcmp.eq.s32.totalorder %v242, %v220
        %vm283 = vcmp.eq.s32.totalorder %v242, %v221
        %vm284 = vcmp.eq.s32.totalorder %v245, %v220
        %vm285 = vcmp.eq.s32.totalorder %v245, %v221
        %vm286 = vcmp.eq.s32.totalorder %v248, %v220
        %vm287 = vcmp.eq.s32.totalorder %v248, %v221
        %vm288 = vcmp.eq.s32.totalorder %v251, %v220
        %vm289 = vcmp.eq.s32.totalorder %v251, %v221
        %vm290 = vcmp.eq.s32.totalorder %v254, %v220
        %vm291 = vcmp.eq.s32.totalorder %v254, %v221
        %vm292 = vcmp.eq.s32.totalorder %v257, %v220
        %vm293 = vcmp.eq.s32.totalorder %v257, %v221
        %vm294 = vcmp.eq.s32.totalorder %v260, %v220
        %vm295 = vcmp.eq.s32.totalorder %v260, %v221
        %vm296 = vcmp.eq.s32.totalorder %v263, %v220
        %vm297 = vcmp.eq.s32.totalorder %v263, %v221
        %vm298 = vcmp.eq.s32.totalorder %v266, %v220
        %vm299 = vcmp.eq.s32.totalorder %v266, %v221
        %vm300 = vcmp.eq.s32.totalorder %v269, %v220
        %vm301 = vcmp.eq.s32.totalorder %v269, %v221
        %v302 = vsel %vm270, 1, 0
        %v303 = vsel %vm271, 1, 0
        %v304 = vsel %vm272, 1, 0
        %v305 = vsel %vm273, 1, 0
        %v306 = vsel %vm274, 1, 0
        %v307 = vsel %vm275, 1, 0
        %v308 = vsel %vm276, 1, 0
        %v309 = vsel %vm277, 1, 0
        %v310 = vsel %vm278, 1, 0
        %v311 = vsel %vm279, 1, 0
        %v312 = vsel %vm280, 1, 0
        %v313 = vsel %vm281, 1, 0
        %v314 = vsel %vm282, 1, 0
        %v315 = vsel %vm283, 1, 0
        %v316 = vsel %vm284, 1, 0
        %v317 = vsel %vm285, 1, 0
        %v318 = vsel %vm286, 1, 0
        %v319 = vsel %vm287, 1, 0
        %v320 = vsel %vm288, 1, 0
        %v321 = vsel %vm289, 1, 0
        %v322 = vsel %vm290, 1, 0
        %v323 = vsel %vm291, 1, 0
        %v324 = vsel %vm292, 1, 0
        %v325 = vsel %vm293, 1, 0
        %v326 = vsel %vm294, 1, 0
        %v327 = vsel %vm295, 1, 0
        %v328 = vsel %vm296, 1, 0
        %v329 = vsel %vm297, 1, 0
        %v330 = vsel %vm298, 1, 0
        %v331 = vsel %vm299, 1, 0
        %v332 = vsel %vm300, 1, 0
        %v333 = vsel %vm301, 1, 0
        %334 = vset.pattern.permute.xlu0 1
        %335 = vperm.xlu0 %334, %v199
        %v336 = vpop.permute.xlu0 %335
        %337 = vset.pattern.permute.xlu0 1
        %338 = vperm.xlu0 %337, %v200
        %v339 = vpop.permute.xlu0 %338
        %340 = vset.pattern.permute.xlu0 1
        %341 = vperm.xlu0 %340, %v201
        %v342 = vpop.permute.xlu0 %341
        %343 = vset.pattern.permute.xlu0 1
        %344 = vperm.xlu0 %343, %v202
        %v345 = vpop.permute.xlu0 %344
        %346 = vset.pattern.permute.xlu0 1
        %347 = vperm.xlu0 %346, %v203
        %v348 = vpop.permute.xlu0 %347
        %349 = vset.pattern.permute.xlu0 1
        %350 = vperm.xlu0 %349, %v204
        %v351 = vpop.permute.xlu0 %350
        %352 = vset.pattern.permute.xlu0 1
        %353 = vperm.xlu0 %352, %v205
        %v354 = vpop.permute.xlu0 %353
        %355 = vset.pattern.permute.xlu0 1
        %356 = vperm.xlu0 %355, %v206
        %v357 = vpop.permute.xlu0 %356
        %358 = vset.pattern.permute.xlu0 1
        %359 = vperm.xlu0 %358, %v207
        %v360 = vpop.permute.xlu0 %359
        %361 = vset.pattern.permute.xlu0 1
        %362 = vperm.xlu0 %361, %v208
        %v363 = vpop.permute.xlu0 %362
        %364 = vset.pattern.permute.xlu0 1
        %365 = vperm.xlu0 %364, %v209
        %v366 = vpop.permute.xlu0 %365
        %367 = vset.pattern.permute.xlu0 1
        %368 = vperm.xlu0 %367, %v210
        %v369 = vpop.permute.xlu0 %368
        %370 = vset.pattern.permute.xlu0 1
        %371 = vperm.xlu0 %370, %v211
        %v372 = vpop.permute.xlu0 %371
        %373 = vset.pattern.permute.xlu0 1
        %374 = vperm.xlu0 %373, %v212
        %v375 = vpop.permute.xlu0 %374
        %376 = vset.pattern.permute.xlu0 1
        %377 = vperm.xlu0 %376, %v213
        %v378 = vpop.permute.xlu0 %377
        %379 = vset.pattern.permute.xlu0 1
        %380 = vperm.xlu0 %379, %v214
        %v381 = vpop.permute.xlu0 %380
        %vm382 = vcmp.eq.s32.totalorder %v336, %v220
        %vm383 = vcmp.eq.s32.totalorder %v336, %v221
        %vm384 = vcmp.eq.s32.totalorder %v339, %v220
        %vm385 = vcmp.eq.s32.totalorder %v339, %v221
        %vm386 = vcmp.eq.s32.totalorder %v342, %v220
        %vm387 = vcmp.eq.s32.totalorder %v342, %v221
        %vm388 = vcmp.eq.s32.totalorder %v345, %v220
        %vm389 = vcmp.eq.s32.totalorder %v345, %v221
        %vm390 = vcmp.eq.s32.totalorder %v348, %v220
        %vm391 = vcmp.eq.s32.totalorder %v348, %v221
        %vm392 = vcmp.eq.s32.totalorder %v351, %v220
        %vm393 = vcmp.eq.s32.totalorder %v351, %v221
        %vm394 = vcmp.eq.s32.totalorder %v354, %v220
        %vm395 = vcmp.eq.s32.totalorder %v354, %v221
        %vm396 = vcmp.eq.s32.totalorder %v357, %v220
        %vm397 = vcmp.eq.s32.totalorder %v357, %v221
        %vm398 = vcmp.eq.s32.totalorder %v360, %v220
        %vm399 = vcmp.eq.s32.totalorder %v360, %v221
        %vm400 = vcmp.eq.s32.totalorder %v363, %v220
        %vm401 = vcmp.eq.s32.totalorder %v363, %v221
        %vm402 = vcmp.eq.s32.totalorder %v366, %v220
        %vm403 = vcmp.eq.s32.totalorder %v366, %v221
        %vm404 = vcmp.eq.s32.totalorder %v369, %v220
        %vm405 = vcmp.eq.s32.totalorder %v369, %v221
        %vm406 = vcmp.eq.s32.totalorder %v372, %v220
        %vm407 = vcmp.eq.s32.totalorder %v372, %v221
        %vm408 = vcmp.eq.s32.totalorder %v375, %v220
        %vm409 = vcmp.eq.s32.totalorder %v375, %v221
        %vm410 = vcmp.eq.s32.totalorder %v378, %v220
        %vm411 = vcmp.eq.s32.totalorder %v378, %v221
        %vm412 = vcmp.eq.s32.totalorder %v381, %v220
        %vm413 = vcmp.eq.s32.totalorder %v381, %v221
        %v414 = vsel %vm382, 1, 0
        %v415 = vsel %vm383, 1, 0
        %v416 = vsel %vm384, 1, 0
        %v417 = vsel %vm385, 1, 0
        %v418 = vsel %vm386, 1, 0
        %v419 = vsel %vm387, 1, 0
        %v420 = vsel %vm388, 1, 0
        %v421 = vsel %vm389, 1, 0
        %v422 = vsel %vm390, 1, 0
        %v423 = vsel %vm391, 1, 0
        %v424 = vsel %vm392, 1, 0
        %v425 = vsel %vm393, 1, 0
        %v426 = vsel %vm394, 1, 0
        %v427 = vsel %vm395, 1, 0
        %v428 = vsel %vm396, 1, 0
        %v429 = vsel %vm397, 1, 0
        %v430 = vsel %vm398, 1, 0
        %v431 = vsel %vm399, 1, 0
        %v432 = vsel %vm400, 1, 0
        %v433 = vsel %vm401, 1, 0
        %v434 = vsel %vm402, 1, 0
        %v435 = vsel %vm403, 1, 0
        %v436 = vsel %vm404, 1, 0
        %v437 = vsel %vm405, 1, 0
        %v438 = vsel %vm406, 1, 0
        %v439 = vsel %vm407, 1, 0
        %v440 = vsel %vm408, 1, 0
        %v441 = vsel %vm409, 1, 0
        %v442 = vsel %vm410, 1, 0
        %v443 = vsel %vm411, 1, 0
        %v444 = vsel %vm412, 1, 0
        %v445 = vsel %vm413, 1, 0
        %v446 = vadd.s32 %v302, %v414
        %v447 = vadd.s32 %v303, %v415
        %v448 = vadd.s32 %v304, %v416
        %v449 = vadd.s32 %v305, %v417
        %v450 = vadd.s32 %v306, %v418
        %v451 = vadd.s32 %v307, %v419
        %v452 = vadd.s32 %v308, %v420
        %v453 = vadd.s32 %v309, %v421
        %v454 = vadd.s32 %v310, %v422
        %v455 = vadd.s32 %v311, %v423
        %v456 = vadd.s32 %v312, %v424
        %v457 = vadd.s32 %v313, %v425
        %v458 = vadd.s32 %v314, %v426
        %v459 = vadd.s32 %v315, %v427
        %v460 = vadd.s32 %v316, %v428
        %v461 = vadd.s32 %v317, %v429
        %v462 = vadd.s32 %v318, %v430
        %v463 = vadd.s32 %v319, %v431
        %v464 = vadd.s32 %v320, %v432
        %v465 = vadd.s32 %v321, %v433
        %v466 = vadd.s32 %v322, %v434
        %v467 = vadd.s32 %v323, %v435
        %v468 = vadd.s32 %v324, %v436
        %v469 = vadd.s32 %v325, %v437
        %v470 = vadd.s32 %v326, %v438
        %v471 = vadd.s32 %v327, %v439
        %v472 = vadd.s32 %v328, %v440
        %v473 = vadd.s32 %v329, %v441
        %v474 = vadd.s32 %v330, %v442
        %v475 = vadd.s32 %v331, %v443
        %v476 = vadd.s32 %v332, %v444
        %v477 = vadd.s32 %v333, %v445
        %478 = vset.pattern.permute.xlu0 2
        %479 = vperm.xlu0 %478, %v199
        %v480 = vpop.permute.xlu0 %479
        %481 = vset.pattern.permute.xlu0 2
        %482 = vperm.xlu0 %481, %v200
        %v483 = vpop.permute.xlu0 %482
        %484 = vset.pattern.permute.xlu0 2
        %485 = vperm.xlu0 %484, %v201
        %v486 = vpop.permute.xlu0 %485
        %487 = vset.pattern.permute.xlu0 2
        %488 = vperm.xlu0 %487, %v202
        %v489 = vpop.permute.xlu0 %488
        %490 = vset.pattern.permute.xlu0 2
        %491 = vperm.xlu0 %490, %v203
        %v492 = vpop.permute.xlu0 %491
        %493 = vset.pattern.permute.xlu0 2
        %494 = vperm.xlu0 %493, %v204
        %v495 = vpop.permute.xlu0 %494
        %496 = vset.pattern.permute.xlu0 2
        %497 = vperm.xlu0 %496, %v205
        %v498 = vpop.permute.xlu0 %497
        %499 = vset.pattern.permute.xlu0 2
        %500 = vperm.xlu0 %499, %v206
        %v501 = vpop.permute.xlu0 %500
        %502 = vset.pattern.permute.xlu0 2
        %503 = vperm.xlu0 %502, %v207
        %v504 = vpop.permute.xlu0 %503
        %505 = vset.pattern.permute.xlu0 2
        %506 = vperm.xlu0 %505, %v208
        %v507 = vpop.permute.xlu0 %506
        %508 = vset.pattern.permute.xlu0 2
        %509 = vperm.xlu0 %508, %v209
        %v510 = vpop.permute.xlu0 %509
        %511 = vset.pattern.permute.xlu0 2
        %512 = vperm.xlu0 %511, %v210
        %v513 = vpop.permute.xlu0 %512
        %514 = vset.pattern.permute.xlu0 2
        %515 = vperm.xlu0 %514, %v211
        %v516 = vpop.permute.xlu0 %515
        %517 = vset.pattern.permute.xlu0 2
        %518 = vperm.xlu0 %517, %v212
        %v519 = vpop.permute.xlu0 %518
        %520 = vset.pattern.permute.xlu0 2
        %521 = vperm.xlu0 %520, %v213
        %v522 = vpop.permute.xlu0 %521
        %523 = vset.pattern.permute.xlu0 2
        %524 = vperm.xlu0 %523, %v214
        %v525 = vpop.permute.xlu0 %524
        %vm526 = vcmp.eq.s32.totalorder %v480, %v220
        %vm527 = vcmp.eq.s32.totalorder %v480, %v221
        %vm528 = vcmp.eq.s32.totalorder %v483, %v220
        %vm529 = vcmp.eq.s32.totalorder %v483, %v221
        %vm530 = vcmp.eq.s32.totalorder %v486, %v220
        %vm531 = vcmp.eq.s32.totalorder %v486, %v221
        %vm532 = vcmp.eq.s32.totalorder %v489, %v220
        %vm533 = vcmp.eq.s32.totalorder %v489, %v221
        %vm534 = vcmp.eq.s32.totalorder %v492, %v220
        %vm535 = vcmp.eq.s32.totalorder %v492, %v221
        %vm536 = vcmp.eq.s32.totalorder %v495, %v220
        %vm537 = vcmp.eq.s32.totalorder %v495, %v221
        %vm538 = vcmp.eq.s32.totalorder %v498, %v220
        %vm539 = vcmp.eq.s32.totalorder %v498, %v221
        %vm540 = vcmp.eq.s32.totalorder %v501, %v220
        %vm541 = vcmp.eq.s32.totalorder %v501, %v221
        %vm542 = vcmp.eq.s32.totalorder %v504, %v220
        %vm543 = vcmp.eq.s32.totalorder %v504, %v221
        %vm544 = vcmp.eq.s32.totalorder %v507, %v220
        %vm545 = vcmp.eq.s32.totalorder %v507, %v221
        %vm546 = vcmp.eq.s32.totalorder %v510, %v220
        %vm547 = vcmp.eq.s32.totalorder %v510, %v221
        %vm548 = vcmp.eq.s32.totalorder %v513, %v220
        %vm549 = vcmp.eq.s32.totalorder %v513, %v221
        %vm550 = vcmp.eq.s32.totalorder %v516, %v220
        %vm551 = vcmp.eq.s32.totalorder %v516, %v221
        %vm552 = vcmp.eq.s32.totalorder %v519, %v220
        %vm553 = vcmp.eq.s32.totalorder %v519, %v221
        %vm554 = vcmp.eq.s32.totalorder %v522, %v220
        %vm555 = vcmp.eq.s32.totalorder %v522, %v221
        %vm556 = vcmp.eq.s32.totalorder %v525, %v220
        %vm557 = vcmp.eq.s32.totalorder %v525, %v221
        %v558 = vsel %vm526, 1, 0
        %v559 = vsel %vm527, 1, 0
        %v560 = vsel %vm528, 1, 0
        %v561 = vsel %vm529, 1, 0
        %v562 = vsel %vm530, 1, 0
        %v563 = vsel %vm531, 1, 0
        %v564 = vsel %vm532, 1, 0
        %v565 = vsel %vm533, 1, 0
        %v566 = vsel %vm534, 1, 0
        %v567 = vsel %vm535, 1, 0
        %v568 = vsel %vm536, 1, 0
        %v569 = vsel %vm537, 1, 0
        %v570 = vsel %vm538, 1, 0
        %v571 = vsel %vm539, 1, 0
        %v572 = vsel %vm540, 1, 0
        %v573 = vsel %vm541, 1, 0
        %v574 = vsel %vm542, 1, 0
        %v575 = vsel %vm543, 1, 0
        %v576 = vsel %vm544, 1, 0
        %v577 = vsel %vm545, 1, 0
        %v578 = vsel %vm546, 1, 0
        %v579 = vsel %vm547, 1, 0
        %v580 = vsel %vm548, 1, 0
        %v581 = vsel %vm549, 1, 0
        %v582 = vsel %vm550, 1, 0
        %v583 = vsel %vm551, 1, 0
        %v584 = vsel %vm552, 1, 0
        %v585 = vsel %vm553, 1, 0
        %v586 = vsel %vm554, 1, 0
        %v587 = vsel %vm555, 1, 0
        %v588 = vsel %vm556, 1, 0
        %v589 = vsel %vm557, 1, 0
        %v590 = vadd.s32 %v446, %v558
        %v591 = vadd.s32 %v447, %v559
        %v592 = vadd.s32 %v448, %v560
        %v593 = vadd.s32 %v449, %v561
        %v594 = vadd.s32 %v450, %v562
        %v595 = vadd.s32 %v451, %v563
        %v596 = vadd.s32 %v452, %v564
        %v597 = vadd.s32 %v453, %v565
        %v598 = vadd.s32 %v454, %v566
        %v599 = vadd.s32 %v455, %v567
        %v600 = vadd.s32 %v456, %v568
        %v601 = vadd.s32 %v457, %v569
        %v602 = vadd.s32 %v458, %v570
        %v603 = vadd.s32 %v459, %v571
        %v604 = vadd.s32 %v460, %v572
        %v605 = vadd.s32 %v461, %v573
        %v606 = vadd.s32 %v462, %v574
        %v607 = vadd.s32 %v463, %v575
        %v608 = vadd.s32 %v464, %v576
        %v609 = vadd.s32 %v465, %v577
        %v610 = vadd.s32 %v466, %v578
        %v611 = vadd.s32 %v467, %v579
        %v612 = vadd.s32 %v468, %v580
        %v613 = vadd.s32 %v469, %v581
        %v614 = vadd.s32 %v470, %v582
        %v615 = vadd.s32 %v471, %v583
        %v616 = vadd.s32 %v472, %v584
        %v617 = vadd.s32 %v473, %v585
        %v618 = vadd.s32 %v474, %v586
        %v619 = vadd.s32 %v475, %v587
        %v620 = vadd.s32 %v476, %v588
        %v621 = vadd.s32 %v477, %v589
        %622 = vset.pattern.permute.xlu0 3
        %623 = vperm.xlu0 %622, %v199
        %v624 = vpop.permute.xlu0 %623
        %625 = vset.pattern.permute.xlu0 3
        %626 = vperm.xlu0 %625, %v200
        %v627 = vpop.permute.xlu0 %626
        %628 = vset.pattern.permute.xlu0 3
        %629 = vperm.xlu0 %628, %v201
        %v630 = vpop.permute.xlu0 %629
        %631 = vset.pattern.permute.xlu0 3
        %632 = vperm.xlu0 %631, %v202
        %v633 = vpop.permute.xlu0 %632
        %634 = vset.pattern.permute.xlu0 3
        %635 = vperm.xlu0 %634, %v203
        %v636 = vpop.permute.xlu0 %635
        %637 = vset.pattern.permute.xlu0 3
        %638 = vperm.xlu0 %637, %v204
        %v639 = vpop.permute.xlu0 %638
        %640 = vset.pattern.permute.xlu0 3
        %641 = vperm.xlu0 %640, %v205
        %v642 = vpop.permute.xlu0 %641
        %643 = vset.pattern.permute.xlu0 3
        %644 = vperm.xlu0 %643, %v206
        %v645 = vpop.permute.xlu0 %644
        %646 = vset.pattern.permute.xlu0 3
        %647 = vperm.xlu0 %646, %v207
        %v648 = vpop.permute.xlu0 %647
        %649 = vset.pattern.permute.xlu0 3
        %650 = vperm.xlu0 %649, %v208
        %v651 = vpop.permute.xlu0 %650
        %652 = vset.pattern.permute.xlu0 3
        %653 = vperm.xlu0 %652, %v209
        %v654 = vpop.permute.xlu0 %653
        %655 = vset.pattern.permute.xlu0 3
        %656 = vperm.xlu0 %655, %v210
        %v657 = vpop.permute.xlu0 %656
        %658 = vset.pattern.permute.xlu0 3
        %659 = vperm.xlu0 %658, %v211
        %v660 = vpop.permute.xlu0 %659
        %661 = vset.pattern.permute.xlu0 3
        %662 = vperm.xlu0 %661, %v212
        %v663 = vpop.permute.xlu0 %662
        %664 = vset.pattern.permute.xlu0 3
        %665 = vperm.xlu0 %664, %v213
        %v666 = vpop.permute.xlu0 %665
        %667 = vset.pattern.permute.xlu0 3
        %668 = vperm.xlu0 %667, %v214
        %v669 = vpop.permute.xlu0 %668
        %vm670 = vcmp.eq.s32.totalorder %v624, %v220
        %vm671 = vcmp.eq.s32.totalorder %v624, %v221
        %vm672 = vcmp.eq.s32.totalorder %v627, %v220
        %vm673 = vcmp.eq.s32.totalorder %v627, %v221
        %vm674 = vcmp.eq.s32.totalorder %v630, %v220
        %vm675 = vcmp.eq.s32.totalorder %v630, %v221
        %vm676 = vcmp.eq.s32.totalorder %v633, %v220
        %vm677 = vcmp.eq.s32.totalorder %v633, %v221
        %vm678 = vcmp.eq.s32.totalorder %v636, %v220
        %vm679 = vcmp.eq.s32.totalorder %v636, %v221
        %vm680 = vcmp.eq.s32.totalorder %v639, %v220
        %vm681 = vcmp.eq.s32.totalorder %v639, %v221
        %vm682 = vcmp.eq.s32.totalorder %v642, %v220
        %vm683 = vcmp.eq.s32.totalorder %v642, %v221
        %vm684 = vcmp.eq.s32.totalorder %v645, %v220
        %vm685 = vcmp.eq.s32.totalorder %v645, %v221
        %vm686 = vcmp.eq.s32.totalorder %v648, %v220
        %vm687 = vcmp.eq.s32.totalorder %v648, %v221
        %vm688 = vcmp.eq.s32.totalorder %v651, %v220
        %vm689 = vcmp.eq.s32.totalorder %v651, %v221
        %vm690 = vcmp.eq.s32.totalorder %v654, %v220
        %vm691 = vcmp.eq.s32.totalorder %v654, %v221
        %vm692 = vcmp.eq.s32.totalorder %v657, %v220
        %vm693 = vcmp.eq.s32.totalorder %v657, %v221
        %vm694 = vcmp.eq.s32.totalorder %v660, %v220
        %vm695 = vcmp.eq.s32.totalorder %v660, %v221
        %vm696 = vcmp.eq.s32.totalorder %v663, %v220
        %vm697 = vcmp.eq.s32.totalorder %v663, %v221
        %vm698 = vcmp.eq.s32.totalorder %v666, %v220
        %vm699 = vcmp.eq.s32.totalorder %v666, %v221
        %vm700 = vcmp.eq.s32.totalorder %v669, %v220
        %vm701 = vcmp.eq.s32.totalorder %v669, %v221
        %v702 = vsel %vm670, 1, 0
        %v703 = vsel %vm671, 1, 0
        %v704 = vsel %vm672, 1, 0
        %v705 = vsel %vm673, 1, 0
        %v706 = vsel %vm674, 1, 0
        %v707 = vsel %vm675, 1, 0
        %v708 = vsel %vm676, 1, 0
        %v709 = vsel %vm677, 1, 0
        %v710 = vsel %vm678, 1, 0
        %v711 = vsel %vm679, 1, 0
        %v712 = vsel %vm680, 1, 0
        %v713 = vsel %vm681, 1, 0
        %v714 = vsel %vm682, 1, 0
        %v715 = vsel %vm683, 1, 0
        %v716 = vsel %vm684, 1, 0
        %v717 = vsel %vm685, 1, 0
        %v718 = vsel %vm686, 1, 0
        %v719 = vsel %vm687, 1, 0
        %v720 = vsel %vm688, 1, 0
        %v721 = vsel %vm689, 1, 0
        %v722 = vsel %vm690, 1, 0
        %v723 = vsel %vm691, 1, 0
        %v724 = vsel %vm692, 1, 0
        %v725 = vsel %vm693, 1, 0
        %v726 = vsel %vm694, 1, 0
        %v727 = vsel %vm695, 1, 0
        %v728 = vsel %vm696, 1, 0
        %v729 = vsel %vm697, 1, 0
        %v730 = vsel %vm698, 1, 0
        %v731 = vsel %vm699, 1, 0
        %v732 = vsel %vm700, 1, 0
        %v733 = vsel %vm701, 1, 0
        %v734 = vadd.s32 %v590, %v702
        %v735 = vadd.s32 %v591, %v703
        %v736 = vadd.s32 %v592, %v704
        %v737 = vadd.s32 %v593, %v705
        %v738 = vadd.s32 %v594, %v706
        %v739 = vadd.s32 %v595, %v707
        %v740 = vadd.s32 %v596, %v708
        %v741 = vadd.s32 %v597, %v709
        %v742 = vadd.s32 %v598, %v710
        %v743 = vadd.s32 %v599, %v711
        %v744 = vadd.s32 %v600, %v712
        %v745 = vadd.s32 %v601, %v713
        %v746 = vadd.s32 %v602, %v714
        %v747 = vadd.s32 %v603, %v715
        %v748 = vadd.s32 %v604, %v716
        %v749 = vadd.s32 %v605, %v717
        %v750 = vadd.s32 %v606, %v718
        %v751 = vadd.s32 %v607, %v719
        %v752 = vadd.s32 %v608, %v720
        %v753 = vadd.s32 %v609, %v721
        %v754 = vadd.s32 %v610, %v722
        %v755 = vadd.s32 %v611, %v723
        %v756 = vadd.s32 %v612, %v724
        %v757 = vadd.s32 %v613, %v725
        %v758 = vadd.s32 %v614, %v726
        %v759 = vadd.s32 %v615, %v727
        %v760 = vadd.s32 %v616, %v728
        %v761 = vadd.s32 %v617, %v729
        %v762 = vadd.s32 %v618, %v730
        %v763 = vadd.s32 %v619, %v731
        %v764 = vadd.s32 %v620, %v732
        %v765 = vadd.s32 %v621, %v733
        %v766 = vcvt.s32.f32 %v734
        %v767 = vcvt.s32.f32 %v735
        %v768 = vcvt.s32.f32 %v736
        %v769 = vcvt.s32.f32 %v737
        %v770 = vcvt.s32.f32 %v738
        %v771 = vcvt.s32.f32 %v739
        %v772 = vcvt.s32.f32 %v740
        %v773 = vcvt.s32.f32 %v741
        %v774 = vcvt.s32.f32 %v742
        %v775 = vcvt.s32.f32 %v743
        %v776 = vcvt.s32.f32 %v744
        %v777 = vcvt.s32.f32 %v745
        %v778 = vcvt.s32.f32 %v746
        %v779 = vcvt.s32.f32 %v747
        %v780 = vcvt.s32.f32 %v748
        %v781 = vcvt.s32.f32 %v749
        %v782 = vcvt.s32.f32 %v750
        %v783 = vcvt.s32.f32 %v751
        %v784 = vcvt.s32.f32 %v752
        %v785 = vcvt.s32.f32 %v753
        %v786 = vcvt.s32.f32 %v754
        %v787 = vcvt.s32.f32 %v755
        %v788 = vcvt.s32.f32 %v756
        %v789 = vcvt.s32.f32 %v757
        %v790 = vcvt.s32.f32 %v758
        %v791 = vcvt.s32.f32 %v759
        %v792 = vcvt.s32.f32 %v760
        %v793 = vcvt.s32.f32 %v761
        %v794 = vcvt.s32.f32 %v762
        %v795 = vcvt.s32.f32 %v763
        %v796 = vcvt.s32.f32 %v764
        %v797 = vcvt.s32.f32 %v765
        %v798 = vpack.c.bf16 %v768, %v766
        %v799 = vpack.c.bf16 %v769, %v767
        %v800 = vpack.c.bf16 %v772, %v770
        %v801 = vpack.c.bf16 %v773, %v771
        %v802 = vpack.c.bf16 %v776, %v774
        %v803 = vpack.c.bf16 %v777, %v775
        %v804 = vpack.c.bf16 %v780, %v778
        %v805 = vpack.c.bf16 %v781, %v779
        %v806 = vpack.c.bf16 %v784, %v782
        %v807 = vpack.c.bf16 %v785, %v783
        %v808 = vpack.c.bf16 %v788, %v786
        %v809 = vpack.c.bf16 %v789, %v787
        %v810 = vpack.c.bf16 %v792, %v790
        %v811 = vpack.c.bf16 %v793, %v791
        %v812 = vpack.c.bf16 %v796, %v794
        %v813 = vpack.c.bf16 %v797, %v795
        %v814 = vld [vmem:[#allocation2] sm:$0xff]
        %v815 = vld [vmem:[#allocation2 + $0x8] sm:$0xff]
        %v816 = vld [vmem:[#allocation2 + $0x10] sm:$0xff]
        %v817 = vld [vmem:[#allocation2 + $0x18] sm:$0xff]
        %v818 = vld [vmem:[#allocation2 + $0x20] sm:$0xff]
        %v819 = vld [vmem:[#allocation2 + $0x28] sm:$0xff]
        %v820 = vld [vmem:[#allocation2 + $0x30] sm:$0xff]
        %v821 = vld [vmem:[#allocation2 + $0x38] sm:$0xff]
        %v822 = vld [vmem:[#allocation2 + $0x40] sm:$0xff]
        %v823 = vld [vmem:[#allocation2 + $0x48] sm:$0xff]
        %v824 = vld [vmem:[#allocation2 + $0x50] sm:$0xff]
        %v825 = vld [vmem:[#allocation2 + $0x58] sm:$0xff]
        %v826 = vld [vmem:[#allocation2 + $0x60] sm:$0xff]
        %v827 = vld [vmem:[#allocation2 + $0x68] sm:$0xff]
        %v828 = vld [vmem:[#allocation2 + $0x70] sm:$0xff]
        %v829 = vld [vmem:[#allocation2 + $0x78] sm:$0xff]
        %v830 = vld [vmem:[%s176] sm:$0xf]
        %v831 = vld [vmem:[%s176 + $0x4] sm:$0xf]
        %v832 = vld [vmem:[%s176 + $0x8] sm:$0xf]
        %v833 = vld [vmem:[%s176 + $0xc] sm:$0xf]
        %v834 = vld [vmem:[%s176 + $0x10] sm:$0xf]
        %v835 = vld [vmem:[%s176 + $0x14] sm:$0xf]
        %v836 = vld [vmem:[%s176 + $0x18] sm:$0xf]
        %v837 = vld [vmem:[%s176 + $0x1c] sm:$0xf]
        %v838 = vld [vmem:[%s176 + $0x20] sm:$0xf]
        %v839 = vld [vmem:[%s176 + $0x24] sm:$0xf]
        %v840 = vld [vmem:[%s176 + $0x28] sm:$0xf]
        %v841 = vld [vmem:[%s176 + $0x2c] sm:$0xf]
        %v842 = vld [vmem:[%s176 + $0x30] sm:$0xf]
        %v843 = vld [vmem:[%s176 + $0x34] sm:$0xf]
        %v844 = vld [vmem:[%s176 + $0x38] sm:$0xf]
        %v845 = vld [vmem:[%s176 + $0x3c] sm:$0xf]
        %v846 = vld [vmem:[%s176 + $0x40] sm:$0xf]
        %v847 = vld [vmem:[%s176 + $0x44] sm:$0xf]
        %v848 = vld [vmem:[%s176 + $0x48] sm:$0xf]
        %v849 = vld [vmem:[%s176 + $0x4c] sm:$0xf]
        %v850 = vld [vmem:[%s176 + $0x50] sm:$0xf]
        %v851 = vld [vmem:[%s176 + $0x54] sm:$0xf]
        %v852 = vld [vmem:[%s176 + $0x58] sm:$0xf]
        %v853 = vld [vmem:[%s176 + $0x5c] sm:$0xf]
        %v854 = vld [vmem:[%s176 + $0x60] sm:$0xf]
        %v855 = vld [vmem:[%s176 + $0x64] sm:$0xf]
        %v856 = vld [vmem:[%s176 + $0x68] sm:$0xf]
        %v857 = vld [vmem:[%s176 + $0x6c] sm:$0xf]
        %v858 = vld [vmem:[%s176 + $0x70] sm:$0xf]
        %v859 = vld [vmem:[%s176 + $0x74] sm:$0xf]
        %v860 = vld [vmem:[%s176 + $0x78] sm:$0xf]
        %v861 = vld [vmem:[%s176 + $0x7c] sm:$0xf]
        %v894 = vunpack.c.l.b16 %v830
        %v895 = vunpack.c.l.b16 %v831
        %v896 = vunpack.c.l.b16 %v832
        %v897 = vunpack.c.l.b16 %v833
        %v898 = vunpack.c.l.b16 %v834
        %v899 = vunpack.c.l.b16 %v835
        %v900 = vunpack.c.l.b16 %v836
        %v901 = vunpack.c.l.b16 %v837
        %v902 = vunpack.c.l.b16 %v838
        %v903 = vunpack.c.l.b16 %v839
        %v904 = vunpack.c.l.b16 %v840
        %v905 = vunpack.c.l.b16 %v841
        %v906 = vunpack.c.l.b16 %v842
        %v907 = vunpack.c.l.b16 %v843
        %v908 = vunpack.c.l.b16 %v844
        %v909 = vunpack.c.l.b16 %v845
        %v910 = vunpack.c.l.b16 %v846
        %v911 = vunpack.c.l.b16 %v847
        %v912 = vunpack.c.l.b16 %v848
        %v913 = vunpack.c.l.b16 %v849
        %v914 = vunpack.c.l.b16 %v850
        %v915 = vunpack.c.l.b16 %v851
        %v916 = vunpack.c.l.b16 %v852
        %v917 = vunpack.c.l.b16 %v853
        %v918 = vunpack.c.l.b16 %v854
        %v919 = vunpack.c.l.b16 %v855
        %v920 = vunpack.c.l.b16 %v856
        %v921 = vunpack.c.l.b16 %v857
        %v922 = vunpack.c.l.b16 %v858
        %v923 = vunpack.c.l.b16 %v859
        %v924 = vunpack.c.l.b16 %v860
        %v925 = vunpack.c.l.b16 %v861
        %v926 = vpack.c.b16 %v895, %v894
        %v927 = vpack.c.b16 %v897, %v896
        %v928 = vpack.c.b16 %v899, %v898
        %v929 = vpack.c.b16 %v901, %v900
        %v930 = vpack.c.b16 %v903, %v902
        %v931 = vpack.c.b16 %v905, %v904
        %v932 = vpack.c.b16 %v907, %v906
        %v933 = vpack.c.b16 %v909, %v908
        %v934 = vpack.c.b16 %v911, %v910
        %v935 = vpack.c.b16 %v913, %v912
        %v936 = vpack.c.b16 %v915, %v914
        %v937 = vpack.c.b16 %v917, %v916
        %v938 = vpack.c.b16 %v919, %v918
        %v939 = vpack.c.b16 %v921, %v920
        %v940 = vpack.c.b16 %v923, %v922
        %v941 = vpack.c.b16 %v925, %v924
        %958 = vmatpush.bf16.msra.mxu0 %v933
        %959 = vmatpush.bf16.msra.mxu0 %v932
        %960 = vmatpush.bf16.msra.mxu0 %v931
        %961 = vmatpush.bf16.msra.mxu0 %v930
        %962 = vmatpush.bf16.msra.mxu0 %v929
        %963 = vmatpush.bf16.msra.mxu0 %v928
        %964 = vmatpush.bf16.msra.mxu0 %v927
        %965 = vmatpush.bf16.msra.mxu0 %v926
        %966 = vmatmul.bf16.gmra.mxu0 %v798
        %v967 = vpop.f32.mrf.mxu0
        %v968 = vadd.f32 0.0, %v967
        %v969 = vpop.f32.mrf.mxu0
        %v970 = vadd.f32 0.0, %v969
        %971 = vmatmul.bf16.gmra.mxu0 %v800
        %v972 = vpop.f32.mrf.mxu0
        %v973 = vadd.f32 0.0, %v972
        %v974 = vpop.f32.mrf.mxu0
        %v975 = vadd.f32 0.0, %v974
        %976 = vmatmul.bf16.gmra.mxu0 %v802
        %v977 = vpop.f32.mrf.mxu0
        %v978 = vadd.f32 0.0, %v977
        %v979 = vpop.f32.mrf.mxu0
        %v980 = vadd.f32 0.0, %v979
        %981 = vmatmul.bf16.gmra.mxu0 %v804
        %v982 = vpop.f32.mrf.mxu0
        %v983 = vadd.f32 0.0, %v982
        %v984 = vpop.f32.mrf.mxu0
        %v985 = vadd.f32 0.0, %v984
        %986 = vmatmul.bf16.gmra.mxu0 %v806
        %v987 = vpop.f32.mrf.mxu0
        %v988 = vadd.f32 0.0, %v987
        %v989 = vpop.f32.mrf.mxu0
        %v990 = vadd.f32 0.0, %v989
        %991 = vmatmul.bf16.gmra.mxu0 %v808
        %v992 = vpop.f32.mrf.mxu0
        %v993 = vadd.f32 0.0, %v992
        %v994 = vpop.f32.mrf.mxu0
        %v995 = vadd.f32 0.0, %v994
        %996 = vmatmul.bf16.gmra.mxu0 %v810
        %v997 = vpop.f32.mrf.mxu0
        %v998 = vadd.f32 0.0, %v997
        %v999 = vpop.f32.mrf.mxu0
        %v1000 = vadd.f32 0.0, %v999
        %1001 = vmatmul.bf16.gmra.mxu0 %v812
        %v1002 = vpop.f32.mrf.mxu0
        %v1003 = vadd.f32 0.0, %v1002
        %v1004 = vpop.f32.mrf.mxu0
        %v1005 = vadd.f32 0.0, %v1004
        %1006 = vdwg.mxu0
        %1007 = vmatpush.bf16.msra.mxu0 %v941
        %1008 = vmatpush.bf16.msra.mxu0 %v940
        %1009 = vmatpush.bf16.msra.mxu0 %v939
        %1010 = vmatpush.bf16.msra.mxu0 %v938
        %1011 = vmatpush.bf16.msra.mxu0 %v937
        %1012 = vmatpush.bf16.msra.mxu0 %v936
        %1013 = vmatpush.bf16.msra.mxu0 %v935
        %1014 = vmatpush.bf16.msra.mxu0 %v934
        %1015 = vmatmul.bf16.gmra.mxu0 %v799
        %v1016 = vpop.f32.mrf.mxu0
        %v1017 = vadd.f32 %v968, %v1016
        %v1018 = vpop.f32.mrf.mxu0
        %v1019 = vadd.f32 %v970, %v1018
        %1020 = vmatmul.bf16.gmra.mxu0 %v801
        %v1021 = vpop.f32.mrf.mxu0
        %v1022 = vadd.f32 %v973, %v1021
        %v1023 = vpop.f32.mrf.mxu0
        %v1024 = vadd.f32 %v975, %v1023
        %1025 = vmatmul.bf16.gmra.mxu0 %v803
        %v1026 = vpop.f32.mrf.mxu0
        %v1027 = vadd.f32 %v978, %v1026
        %v1028 = vpop.f32.mrf.mxu0
        %v1029 = vadd.f32 %v980, %v1028
        %1030 = vmatmul.bf16.gmra.mxu0 %v805
        %v1031 = vpop.f32.mrf.mxu0
        %v1032 = vadd.f32 %v983, %v1031
        %v1033 = vpop.f32.mrf.mxu0
        %v1034 = vadd.f32 %v985, %v1033
        %1035 = vmatmul.bf16.gmra.mxu0 %v807
        %v1036 = vpop.f32.mrf.mxu0
        %v1037 = vadd.f32 %v988, %v1036
        %v1038 = vpop.f32.mrf.mxu0
        %v1039 = vadd.f32 %v990, %v1038
        %1040 = vmatmul.bf16.gmra.mxu0 %v809
        %v1041 = vpop.f32.mrf.mxu0
        %v1042 = vadd.f32 %v993, %v1041
        %v1043 = vpop.f32.mrf.mxu0
        %v1044 = vadd.f32 %v995, %v1043
        %1045 = vmatmul.bf16.gmra.mxu0 %v811
        %v1046 = vpop.f32.mrf.mxu0
        %v1047 = vadd.f32 %v998, %v1046
        %v1048 = vpop.f32.mrf.mxu0
        %v1049 = vadd.f32 %v1000, %v1048
        %1050 = vmatmul.bf16.gmra.mxu0 %v813
        %v1051 = vpop.f32.mrf.mxu0
        %v1052 = vadd.f32 %v1003, %v1051
        %v1053 = vpop.f32.mrf.mxu0
        %v1054 = vadd.f32 %v1005, %v1053
        %1055 = vdwg.mxu0
        %v1056 = vadd.f32 %v814, %v1017
        %v1057 = vadd.f32 %v815, %v1019
        %v1058 = vadd.f32 %v816, %v1022
        %v1059 = vadd.f32 %v817, %v1024
        %v1060 = vadd.f32 %v818, %v1027
        %v1061 = vadd.f32 %v819, %v1029
        %v1062 = vadd.f32 %v820, %v1032
        %v1063 = vadd.f32 %v821, %v1034
        %v1064 = vadd.f32 %v822, %v1037
        %v1065 = vadd.f32 %v823, %v1039
        %v1066 = vadd.f32 %v824, %v1042
        %v1067 = vadd.f32 %v825, %v1044
        %v1068 = vadd.f32 %v826, %v1047
        %v1069 = vadd.f32 %v827, %v1049
        %v1070 = vadd.f32 %v828, %v1052
        %v1071 = vadd.f32 %v829, %v1054
        %1072 = vst [vmem:[#allocation2] sm:$0xff] %v1056
        %1073 = vst [vmem:[#allocation2 + $0x8] sm:$0xff] %v1057
        %1074 = vst [vmem:[#allocation2 + $0x10] sm:$0xff] %v1058
        %1075 = vst [vmem:[#allocation2 + $0x18] sm:$0xff] %v1059
        %1076 = vst [vmem:[#allocation2 + $0x20] sm:$0xff] %v1060
        %1077 = vst [vmem:[#allocation2 + $0x28] sm:$0xff] %v1061
        %1078 = vst [vmem:[#allocation2 + $0x30] sm:$0xff] %v1062
        %1079 = vst [vmem:[#allocation2 + $0x38] sm:$0xff] %v1063
        %1080 = vst [vmem:[#allocation2 + $0x40] sm:$0xff] %v1064
        %1081 = vst [vmem:[#allocation2 + $0x48] sm:$0xff] %v1065
        %1082 = vst [vmem:[#allocation2 + $0x50] sm:$0xff] %v1066
        %1083 = vst [vmem:[#allocation2 + $0x58] sm:$0xff] %v1067
        %1084 = vst [vmem:[#allocation2 + $0x60] sm:$0xff] %v1068
        %1085 = vst [vmem:[#allocation2 + $0x68] sm:$0xff] %v1069
        %1086 = vst [vmem:[#allocation2 + $0x70] sm:$0xff] %v1070
        %1087 = vst [vmem:[#allocation2 + $0x78] sm:$0xff] %v1071
        // Predicated region
        $region33: #{tpu_custom_call.1} parent=27 // pred_check
          %p1088 = pneg %p179
        $region34: #{tpu_custom_call.1} parent=27 // pred_check_branch
          %1090 = sbr.rel (%p1088) target = $region36
        $region35: #{tpu_custom_call.1} parent=27 // pred_region
          %v1091 = vld [vmem:[#allocation2] sm:$0xff]
          %v1092 = vld [vmem:[#allocation2 + $0x8] sm:$0xff]
          %v1093 = vld [vmem:[#allocation2 + $0x10] sm:$0xff]
          %v1094 = vld [vmem:[#allocation2 + $0x18] sm:$0xff]
          %v1095 = vld [vmem:[#allocation2 + $0x20] sm:$0xff]
          %v1096 = vld [vmem:[#allocation2 + $0x28] sm:$0xff]
          %v1097 = vld [vmem:[#allocation2 + $0x30] sm:$0xff]
          %v1098 = vld [vmem:[#allocation2 + $0x38] sm:$0xff]
          %v1099 = vld [vmem:[#allocation2 + $0x40] sm:$0xff]
          %v1100 = vld [vmem:[#allocation2 + $0x48] sm:$0xff]
          %v1101 = vld [vmem:[#allocation2 + $0x50] sm:$0xff]
          %v1102 = vld [vmem:[#allocation2 + $0x58] sm:$0xff]
          %v1103 = vld [vmem:[#allocation2 + $0x60] sm:$0xff]
          %v1104 = vld [vmem:[#allocation2 + $0x68] sm:$0xff]
          %v1105 = vld [vmem:[#allocation2 + $0x70] sm:$0xff]
          %v1106 = vld [vmem:[#allocation2 + $0x78] sm:$0xff]
          %1107 = vst [vmem:[%s165] sm:$0xff] %v1091
          %1108 = vst [vmem:[%s165 + $0x8] sm:$0xff] %v1092
          %1109 = vst [vmem:[%s165 + $0x10] sm:$0xff] %v1093
          %1110 = vst [vmem:[%s165 + $0x18] sm:$0xff] %v1094
          %1111 = vst [vmem:[%s165 + $0x20] sm:$0xff] %v1095
          %1112 = vst [vmem:[%s165 + $0x28] sm:$0xff] %v1096
          %1113 = vst [vmem:[%s165 + $0x30] sm:$0xff] %v1097
          %1114 = vst [vmem:[%s165 + $0x38] sm:$0xff] %v1098
          %1115 = vst [vmem:[%s165 + $0x40] sm:$0xff] %v1099
          %1116 = vst [vmem:[%s165 + $0x48] sm:$0xff] %v1100
          %1117 = vst [vmem:[%s165 + $0x50] sm:$0xff] %v1101
          %1118 = vst [vmem:[%s165 + $0x58] sm:$0xff] %v1102
          %1119 = vst [vmem:[%s165 + $0x60] sm:$0xff] %v1103
          %1120 = vst [vmem:[%s165 + $0x68] sm:$0xff] %v1104
          %1121 = vst [vmem:[%s165 + $0x70] sm:$0xff] %v1105
          %1122 = vst [vmem:[%s165 + $0x78] sm:$0xff] %v1106
        $region36: #{tpu_custom_call.1} parent=27 // pred_fallthru
          _
        %s1123 = sand.u32 %s88, 1
        %s1124 = scalar_lea.sflag [#allocation4], %s1123
        %s1125 = sand.u32 %s88, 1
        %s1126 = smul.addr %s1125, 128
        %s1127 = scalar_lea.vmem [#allocation3], %s1126
        // Predicated region
        $region37: #{tpu_custom_call.1} parent=27 // pred_check
          %p1128 = pneg %p98
        $region38: #{tpu_custom_call.1} parent=27 // pred_check_branch
          %1130 = sbr.rel (%p1128) target = $region40
        $region39: #{tpu_custom_call.1} parent=27 // pred_region
          %s1131 = smul.u32 16, %s20
          %1133 = vsyncadd %s1124, 0
          %s1134 = smul.addr %s1131, 8
          %s1135 = scalar_lea.hbm %s2, %s1134
          %s1136 = sshll.u32 %s1127, 4
          %s1137 = int_to_ptr.vmem [resolvable:$true] %s1136
          %s1138 = sshll.u32 %s1135, 4
          %s1139 = int_to_ptr.hbm [resolvable:$true] %s1138
          %1144 = dma.vmem_to_hbm [thread:$0]  %s1137, 2048, %s1139, %s1124, 128, 128, 8
        $region40: #{tpu_custom_call.1} parent=27 // pred_fallthru
          _
      $region28: #{tpu_custom_call.1} parent=5 // pred_fallthru
        _
      %p1145 = scmp.le.s32.totalorder 2, %s11
      // Predicated region
      $region41: #{tpu_custom_call.1} parent=5 // pred_check
        %p1146 = pneg %p1145
      $region42: #{tpu_custom_call.1} parent=5 // pred_check_branch
        %1148 = sbr.rel (%p1146) target = $region44
      $region43: #{tpu_custom_call.1} parent=5 // pred_region
        %s1149 = ssub.s32 %s11, 2
        // Predicated region
        $region45: #{tpu_custom_call.1} parent=43 // pred_check
          %p1150 = pneg %p104
        $region46: #{tpu_custom_call.1} parent=43 // pred_check_branch
          %1152 = sbr.rel (%p1150) target = $region48
        $region47: #{tpu_custom_call.1} parent=43 // pred_region
          %s1153 = sand.u32 %s89, 1
          %s1154 = scalar_lea.sflag [#allocation4], %s1153
          %s1155 = sand.u32 %s89, 1
          %s1156 = smul.addr %s1155, 128
          %s1157 = scalar_lea.vmem [#allocation3], %s1156
          %1159 = dma.done %s1154, 2048
        $region48: #{tpu_custom_call.1} parent=43 // pred_fallthru
          _
      $region44: #{tpu_custom_call.1} parent=5 // pred_fallthru
        _
    $region6: #{tpu_custom_call.1} parent=1 // loop_footer
      %s15 = sadd.s32 1, %s11
    $region7: #{tpu_custom_call.1} parent=1 // loop_footer_branch
      %10 = sbr.rel target = $region3
    $region8: #{tpu_custom_call.1} parent=1 // loop_exit
      _
    %1160 = vsyncpa [#allocation4], 1
    %s1161 = scalar_lea.sflag [#allocation4], 1
    %1162 = vsyncpa %s1161, 1

</llo_original>
